<compile_context>
chip_gen: v7x
topology: tpu7x:2x2x1
jax: 0.10.0
libtpu: 0.0.40
codegen_flags: <defaults>
</compile_context>

<pallas_src>
import functools

import jax
import jax.numpy as jnp
from jax import lax
from jax.experimental import pallas as pl
from jax.experimental.pallas import tpu as pltpu


def _pick_tile(dim, target):
    """Largest multiple of 8 that divides `dim` and is <= target (else dim)."""
    if dim <= target:
        return dim
    t = (target // 8) * 8
    while t >= 8:
        if dim % t == 0:
            return t
        t -= 8
    return dim


def _normalize_kernel(x_ref, o_ref):
    """Row-wise L2 normalization (torch.nn.functional.normalize, eps=1e-12)."""
    x = x_ref[...].astype(jnp.float32)                        # (tile_q, C)
    norm_sq = jnp.sum(x * x, axis=1, keepdims=True)           # (tile_q, 1)
    # rsqrt(max(||x||^2, 1e-24)) == 1 / max(||x||, 1e-12) for ||x|| >= 1e-12.
    inv = lax.rsqrt(jnp.maximum(norm_sq, 1e-24))
    o_ref[...] = (x * inv).astype(o_ref.dtype)


def _arcface_tile_kernel(q_ref, k_ref, labels_ref, loss_ref,
                         m_scr, l_scr, zy_scr, *, s, m, easy_margin):
    j = pl.program_id(1)

    @pl.when(j == 0)
    def _():
        m_scr[...] = jnp.full_like(m_scr, -jnp.inf)
        l_scr[...] = jnp.zeros_like(l_scr)
        zy_scr[...] = jnp.zeros_like(zy_scr)

    # (tile_q, tile_k) cosine block: contract the feature axis of both operands
    # directly (no explicit transpose / XLU shuffle).
    cos = lax.dot_general(q_ref[...], k_ref[...],
                          (((1,), (1,)), ((), ())),
                          preferred_element_type=jnp.float32)
    tq, tk = cos.shape

    labels = labels_ref[...]                                  # (tile_q, 1) int32
    col_ids = j * tk + lax.broadcasted_iota(jnp.int32, (tq, tk), 1)
    onehot = col_ids == labels                                # (tile_q, tile_k)

    # Margin-adjusted target cosine; only meaningful for rows whose label
    # column falls inside this tile (`hit` gates the z_y accumulator).
    cos_y = jnp.sum(jnp.where(onehot, cos, 0.0), axis=1, keepdims=True)
    hit = jnp.sum(onehot.astype(jnp.float32), axis=1, keepdims=True) > 0.0
    cos_m = cos_y - m
    if easy_margin:
        cos_m = jnp.maximum(cos_m, 0.0)
    else:
        cos_m = jnp.clip(cos_m, -1.0 + m, 1.0 - m)

    # Scaled logits tile with the label column substituted by s*cos_m.
    z = s * jnp.where(onehot, cos_m, cos)                     # (tile_q, tile_k)
    # z at the label position equals s*cos_m by construction — no extra
    # (B, B) select + lane-reduce needed for z_y.
    zy_scr[...] = jnp.where(hit, s * cos_m, zy_scr[...])

    # Online (flash-style) logsumexp across column tiles.
    m_prev = m_scr[...]
    m_new = jnp.maximum(m_prev, jnp.max(z, axis=1, keepdims=True))
    alpha = jnp.exp(m_prev - m_new)
    l_scr[...] = alpha * l_scr[...] + jnp.sum(jnp.exp(z - m_new),
                                              axis=1, keepdims=True)
    m_scr[...] = m_new

    @pl.when(j == pl.num_programs(1) - 1)
    def _():
        lse = m_scr[...] + jnp.log(l_scr[...])
        loss_ref[...] = lse - zy_scr[...]                     # per-row CE loss


def arcface_loss(logits, labels, s=30.0, m=0.5, easy_margin=False,
                 *, mxu_dtype=jnp.float32, block_q=256, block_k=512):
    """logits: (B, C) float; labels: (B,) int, values in [0, B)."""
    B, C = logits.shape
    labels2d = labels.reshape(B, 1).astype(jnp.int32)

    tq = _pick_tile(B, block_q)
    tk = _pick_tile(B, block_k)

    # 48 MiB scoped VMEM: comfortably under v7x's 64 MiB physical budget and
    # trivially fine on v5e/v6e (128 MiB).
    vmem_limit = 48 * 1024 * 1024

    # Pass 1: normalize rows once; emit MXU-operand dtype (bf16 halves DMA and
    # hits the native MXU path; f32 available for tight validation).
    xn = pl.pallas_call(
        _normalize_kernel,
        out_shape=jax.ShapeDtypeStruct((B, C), mxu_dtype),
        grid=(B // tq,),
        in_specs=[pl.BlockSpec((tq, C), lambda i: (i, 0))],
        out_specs=pl.BlockSpec((tq, C), lambda i: (i, 0)),
        compiler_params=pltpu.CompilerParams(
            dimension_semantics=("parallel",),
            vmem_limit_bytes=vmem_limit),
    )(logits)

    # Pass 2: tiled row-block x column-block ArcFace cross-entropy.
    # TODO(synk): labels could live in SMEM via scalar prefetch; kept as a
    # small lane-sparse VMEM tile for simplicity (negligible traffic).
    row_loss = pl.pallas_call(
        functools.partial(_arcface_tile_kernel, s=float(s), m=float(m),
                          easy_margin=easy_margin),
        out_shape=jax.ShapeDtypeStruct((B, 1), jnp.float32),
        grid=(B // tq, B // tk),
        in_specs=[
            pl.BlockSpec((tq, C), lambda i, j: (i, 0)),   # query row block
            pl.BlockSpec((tk, C), lambda i, j: (j, 0)),   # key column block
            pl.BlockSpec((tq, 1), lambda i, j: (i, 0)),   # labels of row block
        ],
        out_specs=pl.BlockSpec((tq, 1), lambda i, j: (i, 0)),
        scratch_shapes=[pltpu.VMEM((tq, 1), jnp.float32)] * 3,
        compiler_params=pltpu.CompilerParams(
            dimension_semantics=("parallel", "arbitrary"),
            vmem_limit_bytes=vmem_limit),
    )(xn, xn, labels2d)

    return jnp.mean(row_loss)


def arcface_loss_ref(logits, labels, s=30.0, m=0.5, easy_margin=False):
    """Pure-JAX reference mirroring the PyTorch module."""
    x = logits / jnp.maximum(
        jnp.linalg.norm(logits, axis=1, keepdims=True), 1e-12)
    cos = x @ x.T
    B = x.shape[0]
    cos_y = cos[jnp.arange(B), labels][:, None]
    cos_m = cos_y - m
    if easy_margin:
        cos_m = jnp.maximum(cos_m, 0.0)
    else:
        cos_m = jnp.clip(cos_m, -1.0 + m, 1.0 - m)
    output = cos.at[jnp.arange(B), labels].set(cos_m[:, 0])
    z = s * output
    logp = z - jax.scipy.special.logsumexp(z, axis=1, keepdims=True)
    return -jnp.mean(logp[jnp.arange(B), labels])


if __name__ == "__main__":
    key = jax.random.PRNGKey(0)
    k1, k2 = jax.random.split(key)

    B, C = 16, 32
    logits = jax.random.normal(k1, (B, C), dtype=jnp.float32)
    # labels index columns of the (B, B) similarity matrix, so they lie in [0, B)
    labels = jax.random.randint(k2, (B,), 0, B, dtype=jnp.int32)

    ref = arcface_loss_ref(logits, labels, s=30.0, m=0.5, easy_margin=False)

    # f32 MXU operands: tight check (small tiles to exercise the 2x2 grid and
    # the online-softmax accumulation path).
    loss_f32 = arcface_loss(logits, labels, s=30.0, m=0.5, easy_margin=False,
                            mxu_dtype=jnp.float32, block_q=8, block_k=8)
    loss_f32 = jax.block_until_ready(loss_f32)
    assert jnp.allclose(loss_f32, ref, rtol=1e-4, atol=1e-4), (loss_f32, ref)

    # bf16 MXU operands: production-speed path, looser tolerance.
    loss_bf16 = arcface_loss(logits, labels, s=30.0, m=0.5, easy_margin=False,
                             mxu_dtype=jnp.bfloat16, block_q=8, block_k=8)
    loss_bf16 = jax.block_until_ready(loss_bf16)
    assert jnp.allclose(loss_bf16, ref, rtol=5e-2, atol=5e-1), (loss_bf16, ref)

    print("KERNEL_OK")
</pallas_src>

<mosaic_0001>
module attributes {stable_mosaic.version = 11 : i64} {
  func.func @_normalize_kernel(%arg0: i32, %arg1: memref<8x32xf32, #tpu.memory_space<vmem>>, %arg2: memref<8x32xf32, #tpu.memory_space<vmem>>) attributes {dimension_semantics = [#tpu.dimension_semantics<parallel>], iteration_bounds = array<i64: 2>, scalar_prefetch = 0 : i64, scratch_operands = 0 : i64, tpu.core_type = #tpu.core_type<tc>, window_params = [{transform_indices = @transform_0, window_bounds = array<i64: 8, 32>}, {transform_indices = @transform_1, window_bounds = array<i64: 8, 32>}]} {
    %c0 = arith.constant 0 : index
    %c0_0 = arith.constant 0 : index
    %0 = vector.load %arg1[%c0, %c0_0] : memref<8x32xf32, #tpu.memory_space<vmem>>, vector<8x32xf32>
    %1 = arith.mulf %0, %0 : vector<8x32xf32>
    %cst = arith.constant dense<0.000000e+00> : vector<8xf32>
    %2 = vector.multi_reduction <add>, %1, %cst [1] : vector<8x32xf32> to vector<8xf32>
    %3 = vector.shape_cast %2 : vector<8xf32> to vector<8x1xf32>
    %cst_1 = arith.constant 1.000000e-24 : f32
    %4 = vector.broadcast %cst_1 : f32 to vector<8x1xf32>
    %5 = arith.maximumf %3, %4 : vector<8x1xf32>
    %6 = math.rsqrt %5 : vector<8x1xf32>
    %7 = vector.broadcast %6 : vector<8x1xf32> to vector<8x32xf32>
    %8 = arith.mulf %0, %7 : vector<8x32xf32>
    %c0_2 = arith.constant 0 : index
    %c0_3 = arith.constant 0 : index
    %9 = vector.load %arg2[%c0_2, %c0_3] : memref<8x32xf32, #tpu.memory_space<vmem>>, vector<8x32xf32>
    tpu.vector_store %arg2[%c0_2, %c0_3], %8 {strides = array<i32>} : memref<8x32xf32, #tpu.memory_space<vmem>>, vector<8x32xf32>,
    return
  }
  func.func @transform_0(%arg0: i32) -> (i32, i32) {
    %c0_i32 = arith.constant 0 : i32
    %c0_i32_0 = arith.constant 0 : i32
    return %arg0, %c0_i32 : i32, i32
  }
  func.func @transform_1(%arg0: i32) -> (i32, i32) {
    %c0_i32 = arith.constant 0 : i32
    %c0_i32_0 = arith.constant 0 : i32
    return %arg0, %c0_i32 : i32, i32
  }
}

</mosaic_0001>

<llo_original>
// kernel: tpu_custom_call.1
$region0: #{tpu_custom_call.1}
  #allocation0 [shape = 'u32[]', space=smem, size = 0x4, offset = 0x4, fixed_abs, tag = 'smem constant byte address 0x4 - core index']
  #allocation1 [shape = 'u32[144,128]{1,0:T(1,128)}', space=vmem, size = 0x12000, scoped, tag = 'internal scratch']
  %s0 = inlined_call_operand.hbm [shape: f32[16,32], index: 0, kind: input, shape index: {}]
  %s1 = inlined_call_operand.hbm [shape: f32[16,32], index: 1, kind: output, shape index: {}]
  %s2 = sld [smem:[#allocation0]]
  $region41: #{tpu_custom_call.1} parent=0
    _
  %s4 = ssub.s32 1, %s2
  %s5 = scalar_select 0, %s4, %s2
  $region1: #{tpu_custom_call.1} parent=0
    #allocation2 [shape = 'u8[8192]{0}', space=vmem, size = 0x2000, scoped, tag = 'input window, operand 0']
    #allocation3 [shape = 's32[2]{0}', space=sflag, size = 0x8, scoped, tag = 'scoped memory for tpu_custom_call.1']
    #allocation4 [shape = 's32[2]{0}', space=sflag, size = 0x8, scoped, tag = 'scoped memory for tpu_custom_call.1']
    #allocation5 [shape = 'u8[8192]{0}', space=vmem, size = 0x2000, scoped, tag = 'output window, operand 0']
    %6 = vsyncpa [#allocation3], 0
    %s7 = scalar_lea.sflag [#allocation3], 1
    %8 = vsyncpa %s7, 0
    %9 = vsyncpa [#allocation4], 0
    %s10 = scalar_lea.sflag [#allocation4], 1
    %11 = vsyncpa %s10, 0
    loop: start=0, step=1, limit=4
    $region2: #{tpu_custom_call.1} parent=1 // loop_pre_header
      _
    $region3: #{tpu_custom_call.1} parent=1 // loop_header
      %s13 = sphi 0, %s17
      %p14 = scmp.ge.s32.totalorder %s13, 4
      %s23 = sphi 0, %s25
      %s26 = sphi 0, %s23
      %s27 = sphi 0, %s26
      %s43 = sphi 0, %s27
      %s49 = sphi 0, %s51
      %s52 = sphi 0, %s49
      %s53 = sphi 0, %s52
      %s69 = sphi 0, %s53
    $region4: #{tpu_custom_call.1} parent=1 // loop_header_branch
      %16 = sbr.rel (%p14) target = $region8
    $region5: #{tpu_custom_call.1} parent=1 // loop_body
      %s18 = ssub.s32 %s13, 1
      %s19 = ssub.s32 %s13, 2
      %s20 = sadd.s32 %s13, 1
      %s21 = ssub.s32 %s13, %s20
      %p22 = scmp.eq.s32.totalorder %s21, 0
      %s24 = sadd.s32 %s23, 1
      %s25 = scalar_select %p22, %s23, %s24
      %p28 = pneg %p22
      %p29 = scmp.eq.s32.totalorder %s13, 1
      %p30 = por %p28, %p29
      %p31 = scmp.ne.s32.totalorder %s23, %s26
      %p32 = scmp.eq.s32.totalorder %s13, 0
      %p33 = por %p31, %p32
      %p34 = scmp.ne.s32.totalorder %s23, %s26
      %p35 = scmp.eq.s32.totalorder %s18, 1
      %p36 = por %p34, %p35
      %p37 = scmp.ne.s32.totalorder %s26, %s27
      %p38 = scmp.eq.s32.totalorder %s18, 0
      %p39 = por %p37, %p38
      %p40 = scmp.ne.s32.totalorder %s26, %s27
      %p41 = scmp.eq.s32.totalorder %s19, 1
      %p42 = por %p40, %p41
      %p44 = scmp.ne.s32.totalorder %s27, %s43
      %p45 = scmp.eq.s32.totalorder %s19, 0
      %p46 = por %p44, %p45
      %s47 = ssub.s32 %s13, %s20
      %p48 = scmp.eq.s32.totalorder %s47, 0
      %s50 = sadd.s32 %s49, 1
      %s51 = scalar_select %p48, %s49, %s50
      %p54 = pneg %p48
      %p55 = scmp.eq.s32.totalorder %s13, 1
      %p56 = por %p54, %p55
      %p57 = scmp.ne.s32.totalorder %s49, %s52
      %p58 = scmp.eq.s32.totalorder %s13, 0
      %p59 = por %p57, %p58
      %p60 = scmp.ne.s32.totalorder %s49, %s52
      %p61 = scmp.eq.s32.totalorder %s18, 1
      %p62 = por %p60, %p61
      %p63 = scmp.ne.s32.totalorder %s52, %s53
      %p64 = scmp.eq.s32.totalorder %s18, 0
      %p65 = por %p63, %p64
      %p66 = scmp.ne.s32.totalorder %s52, %s53
      %p67 = scmp.eq.s32.totalorder %s19, 1
      %p68 = por %p66, %p67
      %p70 = scmp.ne.s32.totalorder %s53, %s69
      %p71 = scmp.eq.s32.totalorder %s19, 0
      %p72 = por %p70, %p71
      %p73 = scmp.le.s32.totalorder 1, %s13
      %p74 = scmp.lt.s32.totalorder %s13, 3
      %p75 = pnand %p73, %p74
      %p76 = pneg %p75
      // Predicated region
      $region9: #{tpu_custom_call.1} parent=5 // pred_check
        _
      $region10: #{tpu_custom_call.1} parent=5 // pred_check_branch
        %78 = sbr.rel (%p75) target = $region12
      $region11: #{tpu_custom_call.1} parent=5 // pred_region
        %s79 = ssub.s32 %s13, 1
      $region12: #{tpu_custom_call.1} parent=5 // pred_fallthru
        _
      %p80 = scmp.lt.s32.totalorder %s13, 2
      // Predicated region
      $region13: #{tpu_custom_call.1} parent=5 // pred_check
        %p81 = pneg %p80
      $region14: #{tpu_custom_call.1} parent=5 // pred_check_branch
        %83 = sbr.rel (%p81) target = $region16
      $region15: #{tpu_custom_call.1} parent=5 // pred_region
        // Predicated region
        $region17: #{tpu_custom_call.1} parent=15 // pred_check
          %p84 = pneg %p33
        $region18: #{tpu_custom_call.1} parent=15 // pred_check_branch
          %86 = sbr.rel (%p84) target = $region20
        $region19: #{tpu_custom_call.1} parent=15 // pred_region
          %s87 = sand.u32 %s23, 1
          %s88 = scalar_lea.sflag [#allocation3], %s87
          %s89 = sand.u32 %s23, 1
          %s90 = smul.addr %s89, 8
          %s91 = scalar_lea.vmem [#allocation2], %s90
          %s93 = ssub.s32 128, 128
          %94 = vsyncadd %s88, %s93
          %s95 = smul.addr %s13, 128
          %s96 = scalar_lea.hbm %s0, %s95
          %s98 = sshll.u32 %s91, 4
          %s99 = int_to_ptr.vmem [resolvable:$true] %s98
          %101 = dma.hbm_to_vmem [thread:$0]  %s96, 128, %s99, %s88
        $region20: #{tpu_custom_call.1} parent=15 // pred_fallthru
          _
      $region16: #{tpu_custom_call.1} parent=5 // pred_fallthru
        _
      %p102 = scmp.le.s32.totalorder 1, %s13
      %p103 = scmp.lt.s32.totalorder %s13, 3
      %p104 = pnand %p102, %p103
      %p105 = pneg %p104
      // Predicated region
      $region21: #{tpu_custom_call.1} parent=5 // pred_check
        _
      $region22: #{tpu_custom_call.1} parent=5 // pred_check_branch
        %107 = sbr.rel (%p104) target = $region24
      $region23: #{tpu_custom_call.1} parent=5 // pred_region
        %s108 = ssub.s32 %s13, 1
        %s109 = sand.u32 %s26, 1
        %s110 = scalar_lea.sflag [#allocation3], %s109
        %s111 = sand.u32 %s26, 1
        %s112 = smul.addr %s111, 8
        %s113 = scalar_lea.vmem [#allocation2], %s112
        // Predicated region
        $region25: #{tpu_custom_call.1} parent=23 // pred_check
          %p114 = pneg %p39
        $region26: #{tpu_custom_call.1} parent=23 // pred_check_branch
          %116 = sbr.rel (%p114) target = $region28
        $region27: #{tpu_custom_call.1} parent=23 // pred_region
          %117 = dma.done %s110, 128
        $region28: #{tpu_custom_call.1} parent=23 // pred_fallthru
          _
        %s118 = sand.u32 %s26, 1
        %s119 = scalar_lea.sflag [#allocation3], %s118
        %s120 = sand.u32 %s26, 1
        %s121 = smul.addr %s120, 8
        %s122 = scalar_lea.vmem [#allocation2], %s121
        %p123 = pneg %p39
        %p124 = pneg %p36
        %p125 = pneg %p65
        %p126 = pneg %p62
        %s127 = sand.u32 %s52, 1
        %s128 = scalar_lea.sflag [#allocation4], %s127
        %s129 = sand.u32 %s52, 1
        %s130 = smul.addr %s129, 8
        %s131 = scalar_lea.vmem [#allocation5], %s130
        %v132 = vld [vmem:[%s113] sm:$0xff]
        %v133 = vmul.f32 %v132, %v132
        %vm134 = vcmask 261120
        %v135 = vsel %vm134, %v133, 0.0
        %136 = vadd.xlane.f32.xlu0 %v135
        %v137 = vpop.xlane.xlu0 %136
        %v138 = vmax.f32 %v137, 1e-24
        %v139 = vrsqrt.pop %v138
        %v140 = vmul.f32 %v132, %v139
        %141 = vst.msk [vmem:[%s131] sm:$0xff] %vm134, %v140
        %s142 = sand.u32 %s52, 1
        %s143 = scalar_lea.sflag [#allocation4], %s142
        %s144 = sand.u32 %s52, 1
        %s145 = smul.addr %s144, 8
        %s146 = scalar_lea.vmem [#allocation5], %s145
        // Predicated region
        $region29: #{tpu_custom_call.1} parent=23 // pred_check
          %p147 = pneg %p62
        $region30: #{tpu_custom_call.1} parent=23 // pred_check_branch
          %149 = sbr.rel (%p147) target = $region32
        $region31: #{tpu_custom_call.1} parent=23 // pred_region
          %s151 = ssub.s32 128, 128
          %152 = vsyncadd %s143, %s151
          %s153 = smul.addr %s18, 128
          %s154 = scalar_lea.hbm %s1, %s153
          %s156 = sshll.u32 %s146, 4
          %s157 = int_to_ptr.vmem [resolvable:$true] %s156
          %159 = dma.vmem_to_hbm [thread:$0]  %s157, 128, %s154, %s143
        $region32: #{tpu_custom_call.1} parent=23 // pred_fallthru
          _
      $region24: #{tpu_custom_call.1} parent=5 // pred_fallthru
        _
      %p160 = scmp.le.s32.totalorder 2, %s13
      // Predicated region
      $region33: #{tpu_custom_call.1} parent=5 // pred_check
        %p161 = pneg %p160
      $region34: #{tpu_custom_call.1} parent=5 // pred_check_branch
        %163 = sbr.rel (%p161) target = $region36
      $region35: #{tpu_custom_call.1} parent=5 // pred_region
        %s164 = ssub.s32 %s13, 2
        // Predicated region
        $region37: #{tpu_custom_call.1} parent=35 // pred_check
          %p165 = pneg %p68
        $region38: #{tpu_custom_call.1} parent=35 // pred_check_branch
          %167 = sbr.rel (%p165) target = $region40
        $region39: #{tpu_custom_call.1} parent=35 // pred_region
          %s168 = sand.u32 %s53, 1
          %s169 = scalar_lea.sflag [#allocation4], %s168
          %s170 = sand.u32 %s53, 1
          %s171 = smul.addr %s170, 8
          %s172 = scalar_lea.vmem [#allocation5], %s171
          %173 = dma.done %s169, 128
        $region40: #{tpu_custom_call.1} parent=35 // pred_fallthru
          _
      $region36: #{tpu_custom_call.1} parent=5 // pred_fallthru
        _
    $region6: #{tpu_custom_call.1} parent=1 // loop_footer
      %s17 = sadd.s32 1, %s13
    $region7: #{tpu_custom_call.1} parent=1 // loop_footer_branch
      %12 = sbr.rel target = $region3
    $region8: #{tpu_custom_call.1} parent=1 // loop_exit
      _
    %174 = vsyncpa [#allocation3], 1
    %s175 = scalar_lea.sflag [#allocation3], 1
    %176 = vsyncpa %s175, 1
    %177 = vsyncpa [#allocation4], 1
    %s178 = scalar_lea.sflag [#allocation4], 1
    %179 = vsyncpa %s178, 1

</llo_original>
